<compile_context>
chip_gen: v5e
topology: v5e:2x2
jax: 0.10.0
libtpu: 0.0.40
codegen_flags: <defaults>
</compile_context>

<pallas_src>
import functools

import jax
import jax.numpy as jnp
from jax.experimental import pallas as pl
from jax.experimental.pallas import tpu as pltpu


_POOL_ROWS = 16  # sublane group kept by the in-kernel max (bf16 & f32 tile friendly)


def _cdiv(a, b):
    return -(-a // b)


def _round_up(x, m):
    return _cdiv(x, m) * m


def _default_bf16_elementwise():
    """bf16 bias/ReLU only where the VPU has a bf16 path (v6e / v7x)."""
    try:
        kind = jax.devices()[0].device_kind.lower()
    except Exception:
        return False
    return any(tag in kind for tag in ("v6", "v7", "7x"))


# ----------------------------------------------------------------------------
# Pallas kernel: per-point MLP (3->64->128->256) + running global max pool.
# ----------------------------------------------------------------------------
def _pointnet_kernel(x_ref, w1, b1, w2, b2, w3, b3, o_ref, *, bf16_ew):
    n = pl.program_id(2)

    @pl.when(n == 0)
    def _init():
        o_ref[...] = jnp.full(o_ref.shape, -jnp.inf, o_ref.dtype)

    x = x_ref[...]                                    # (TN, 8) bf16; cols 3.. are zero

    def act(d, b_ref):
        # d: f32 MXU output. Returns a bf16 activation for the next MXU operand.
        if bf16_ew:
            # bf16 bias-add + ReLU: halves VPU vreg traffic (v6e/v7x bf16 VALU).
            return jnp.maximum(
                d.astype(jnp.bfloat16) + b_ref[...].astype(jnp.bfloat16), 0.0)
        # v5e: no bf16 VALU path -> f32 elementwise, cast once at the end.
        return jnp.maximum(d + b_ref[...], 0.0).astype(jnp.bfloat16)

    # All three per-point layers on the MXU: bf16 operands, f32 accumulate.
    h = act(jnp.dot(x, w1[...], preferred_element_type=jnp.float32), b1)   # (TN, 64)
    h = act(jnp.dot(h, w2[...], preferred_element_type=jnp.float32), b2)   # (TN, 128)
    d3 = jnp.dot(h, w3[...], preferred_element_type=jnp.float32)           # (TN, 256) f32
    if bf16_ew:
        h3 = jnp.maximum(d3.astype(jnp.bfloat16) + b3[...].astype(jnp.bfloat16), 0.0)
    else:
        h3 = jnp.maximum(d3 + b3[...], 0.0)

    # Running max pool: fold rows into a (16, 256) slab with a vreg-wise VPU max
    # tree (no per-step cross-sublane XLU reduce). The accumulator is the
    # revisited output block itself (kept f32); rows collapse in the wrapper.
    tn, c3 = h3.shape
    part = jnp.max(h3.reshape(tn // _POOL_ROWS, _POOL_ROWS, c3), axis=0)
    o_ref[...] = jnp.maximum(o_ref[...], part.astype(jnp.float32))


def _fc_head(pooled_f32, params):
    """Tiny FC head 256->128->40 on the pooled features (runs as plain XLA)."""
    g = jnp.maximum(
        jnp.dot(pooled_f32.astype(jnp.bfloat16), params["wf1"],
                preferred_element_type=jnp.float32) + params["bf1"], 0.0)
    return (jnp.dot(g.astype(jnp.bfloat16), params["wf2"],
                    preferred_element_type=jnp.float32) + params["bf2"])


def pointnet_features(points, params, *, tile_n=4096, bf16_elementwise=None):
    """points: (B, N, 3) channels-last. Returns (B, n_classes) float32 logits."""
    points = jnp.asarray(points)
    B, N, cin = points.shape
    assert cin == params["cin"]
    if bf16_elementwise is None:
        bf16_elementwise = _default_bf16_elementwise()

    # bf16 input + zero-pad channels 3 -> 8: sublane-aligned MXU contraction,
    # half the HBM tile bytes, no per-step cast pass in the kernel.
    cin_pad = params["cin_pad"]
    pts = jnp.pad(points.astype(jnp.bfloat16), ((0, 0), (0, 0), (0, cin_pad - cin)))

    # Adaptive chunking (minimal replication padding). Keep n_chunks even when
    # B == 1 so a leading size-2 "parallel" axis can feed both v7x TensorCores.
    n_chunks = max(1, _cdiv(N, tile_n))
    if B == 1:
        n_chunks = max(2, n_chunks)
    if n_chunks > 1 and n_chunks % 2:
        n_chunks += 1
    tn = _round_up(_cdiv(N, n_chunks), _POOL_ROWS)
    n_pad = tn * n_chunks
    if n_pad != N:
        reps = _cdiv(n_pad, N)
        # Replicating existing points leaves the global MAX pool unchanged.
        pts = jnp.concatenate([pts] * reps, axis=1)[:, :n_pad]
    csplit = 2 if n_chunks % 2 == 0 else 1
    n_per_core = n_chunks // csplit

    c3 = params["w3"].shape[-1]
    weight_args = (params["w1"], params["b1"], params["w2"], params["b2"],
                   params["w3"], params["b3"])

    def _resident(arr):
        # Full-array block, constant index_map -> stays VMEM-resident across grid.
        # TODO(synk): pipeline_mode=pl.Buffered(1) would drop the redundant second
        #   buffer for these constants; left at the default for portability.
        return pl.BlockSpec(arr.shape, lambda c, b, n: (0, 0))

    grid_spec = pltpu.PrefetchScalarGridSpec(
        num_scalar_prefetch=0,
        grid=(csplit, B, n_per_core),
        in_specs=[pl.BlockSpec((None, tn, cin_pad),
                               lambda c, b, n: (b, c * n_per_core + n, 0))]
                 + [_resident(w) for w in weight_args],
        out_specs=pl.BlockSpec((None, None, _POOL_ROWS, c3),
                               lambda c, b, n: (c, b, 0, 0)),
    )

    partial_max = pl.pallas_call(
        functools.partial(_pointnet_kernel, bf16_ew=bf16_elementwise),
        out_shape=jax.ShapeDtypeStruct((csplit, B, _POOL_ROWS, c3), jnp.float32),
        grid_spec=grid_spec,
        compiler_params=pltpu.CompilerParams(
            dimension_semantics=("parallel", "parallel", "arbitrary"),
            # ~10-15 MiB actually needed at tn=4096; 48 MiB keeps headroom and is
            # safe on v7x's 64 MiB physical VMEM (v5e/v6e have 128 MiB).
            vmem_limit_bytes=48 * 1024 * 1024),
    )(pts, *weight_args)

    pooled = jnp.max(partial_max, axis=(0, 2))    # collapse core-split + 16 rows
    return _fc_head(pooled, params)               # (B, n_out)


# ----------------------------------------------------------------------------
# Parameters (deterministic in-script surrogate weights).
# ----------------------------------------------------------------------------
def _init_pointnet_params(key, dims_point=(3, 64, 128, 256), dims_fc=(256, 128, 40),
                          cin_pad=8):
    params = {"n_out": dims_fc[-1], "cin": dims_point[0], "cin_pad": cin_pad}
    keys = jax.random.split(key, (len(dims_point) - 1) + (len(dims_fc) - 1))
    ki = 0
    # Per-point (1x1-conv-equivalent) layers: bf16 MXU operands, f32 biases.
    for i, (ci, co) in enumerate(zip(dims_point[:-1], dims_point[1:]), start=1):
        scale = 1.0 / jnp.sqrt(jnp.float32(ci))
        w = jax.random.normal(keys[ki], (ci, co), jnp.float32) * scale
        ki += 1
        if i == 1:
            # Zero rows 3..7 so the padded input channels contribute exactly 0.
            w = jnp.pad(w, ((0, cin_pad - ci), (0, 0)))
        params[f"w{i}"] = w.astype(jnp.bfloat16)
        params[f"b{i}"] = jnp.zeros((1, co), jnp.float32)
    # FC head (runs in the wrapper).
    for j, (ci, co) in enumerate(zip(dims_fc[:-1], dims_fc[1:]), start=1):
        scale = 1.0 / jnp.sqrt(jnp.float32(ci))
        w = jax.random.normal(keys[ki], (ci, co), jnp.float32) * scale
        ki += 1
        params[f"wf{j}"] = w.astype(jnp.bfloat16)
        params[f"bf{j}"] = jnp.zeros((1, co), jnp.float32)
    return params


def _pointnet_ref(points, params, *, bf16_elementwise):
    """Pure-JAX reference mirroring the kernel math/precision exactly."""
    cin, cin_pad = params["cin"], params["cin_pad"]
    x = jnp.pad(points.astype(jnp.bfloat16), ((0, 0), (0, 0), (0, cin_pad - cin)))

    def act(d, b):
        if bf16_elementwise:
            return jnp.maximum(d.astype(jnp.bfloat16) + b.astype(jnp.bfloat16), 0.0)
        return jnp.maximum(d + b, 0.0).astype(jnp.bfloat16)

    h = act(jnp.einsum("bnc,cf->bnf", x, params["w1"],
                       preferred_element_type=jnp.float32), params["b1"])
    h = act(jnp.einsum("bnc,cf->bnf", h, params["w2"],
                       preferred_element_type=jnp.float32), params["b2"])
    d3 = jnp.einsum("bnc,cf->bnf", h, params["w3"],
                    preferred_element_type=jnp.float32)
    if bf16_elementwise:
        h3 = jnp.maximum(d3.astype(jnp.bfloat16) + params["b3"].astype(jnp.bfloat16), 0.0)
    else:
        h3 = jnp.maximum(d3 + params["b3"], 0.0)
    pooled = jnp.max(h3, axis=1).astype(jnp.float32)
    return _fc_head(pooled, params)


# ----------------------------------------------------------------------------
# FeatureExtractor module (JAX port of the PyTorch nn.Module forward).
# ----------------------------------------------------------------------------
class FeatureExtractor:
    def __init__(self, shape_features_size, views_config, shape_extractor,
                 screatch_feature_extractor=True, key=None):
        self.shape_features_size = shape_features_size
        if views_config in ("circular", "random", "spherical", "custom"):
            self.features_origin = "zeros"
        else:
            self.features_origin = "points_features"
            if key is None:
                key = jax.random.PRNGKey(0)
            # TODO(synk): like the original (PointNet(40)), the points branch is
            #   hard-wired to 40 classes; if shape_features_size != 40 the two
            #   branches disagree in width (same behaviour as the PyTorch code).
            self.params = _init_pointnet_params(key)

    def __call__(self, extra_info=None, c_batch_size=1):
        if self.features_origin == "zeros":
            # Plain XLA zeros; a pallas_call here would only add launch overhead.
            return jnp.zeros((c_batch_size, self.shape_features_size), jnp.float32)
        # PyTorch: extra_info.transpose(1, 2) -> (B, 3, N) for Conv1d(k=1). A 1x1
        # Conv1d over channels is a per-point linear, so the kernel consumes the
        # channels-last (B, N, 3) layout directly (same math, no transpose).
        feats = pointnet_features(extra_info, self.params)
        # Mirrors `features[0].view(c_batch_size, -1)`.
        return feats.reshape(c_batch_size, -1)


# ----------------------------------------------------------------------------
if __name__ == "__main__":
    key = jax.random.PRNGKey(0)
    k_pts, k_model = jax.random.split(key)

    B = 2                 # c_batch_size
    N = 64                # points per shape
    F = 40                # shape_features_size

    # Branch 1: 'zeros' (e.g. views_config='circular')
    fe_zeros = FeatureExtractor(F, "circular", "PointNet")
    out_zeros = jax.block_until_ready(fe_zeros(c_batch_size=B))
    assert out_zeros.shape == (B, F)
    assert bool(jnp.all(out_zeros == 0.0))

    # Branch 2: 'points_features' (e.g. views_config='learned_direct')
    points = jax.random.normal(k_pts, (B, N, 3), jnp.float32)
    fe_points = FeatureExtractor(F, "learned_direct", "PointNet",
                                 screatch_feature_extractor=True, key=k_model)
    out_points = jax.block_until_ready(fe_points(points, c_batch_size=B))
    assert out_points.shape == (B, F)
    assert bool(jnp.all(jnp.isfinite(out_points)))

    flag = _default_bf16_elementwise()
    ref = _pointnet_ref(points, fe_points.params,
                        bf16_elementwise=flag).reshape(B, -1)
    err = float(jnp.max(jnp.abs(out_points - ref)))
    assert jnp.allclose(out_points, ref, atol=2e-2, rtol=2e-2), err

    # Batch-1, ragged point count: exercises the core-split (csplit=2) and the
    # adaptive-chunk / replication-padding paths.
    pts1 = jax.random.normal(jax.random.PRNGKey(3), (1, 50, 3), jnp.float32)
    out1 = jax.block_until_ready(pointnet_features(pts1, fe_points.params))
    ref1 = _pointnet_ref(pts1, fe_points.params, bf16_elementwise=flag)
    assert out1.shape == (1, F)
    err1 = float(jnp.max(jnp.abs(out1 - ref1)))
    assert jnp.allclose(out1, ref1, atol=2e-2, rtol=2e-2), err1

    print("KERNEL_OK")
</pallas_src>

<mosaic_0001>
module attributes {stable_mosaic.version = 11 : i64} {
  func.func @_pointnet_kernel(%arg0: i32, %arg1: i32, %arg2: i32, %arg3: memref<1x64x8xbf16, #tpu.memory_space<vmem>>, %arg4: memref<8x64xbf16, #tpu.memory_space<vmem>>, %arg5: memref<1x64xf32, #tpu.memory_space<vmem>>, %arg6: memref<64x128xbf16, #tpu.memory_space<vmem>>, %arg7: memref<1x128xf32, #tpu.memory_space<vmem>>, %arg8: memref<128x256xbf16, #tpu.memory_space<vmem>>, %arg9: memref<1x256xf32, #tpu.memory_space<vmem>>, %arg10: memref<1x1x16x256xf32, #tpu.memory_space<vmem>>) attributes {dimension_semantics = [#tpu.dimension_semantics<parallel>, #tpu.dimension_semantics<parallel>, #tpu.dimension_semantics<arbitrary>], iteration_bounds = array<i64: 1, 2, 1>, scalar_prefetch = 0 : i64, scratch_operands = 0 : i64, tpu.core_type = #tpu.core_type<tc>, window_params = [{transform_indices = @transform_0, window_bounds = array<i64: 1, 64, 8>}, {pipeline_mode = #tpu.pipeline_mode<synchronous>, transform_indices = @transform_1, window_bounds = array<i64: 8, 64>}, {pipeline_mode = #tpu.pipeline_mode<synchronous>, transform_indices = @transform_2, window_bounds = array<i64: 1, 64>}, {pipeline_mode = #tpu.pipeline_mode<synchronous>, transform_indices = @transform_3, window_bounds = array<i64: 64, 128>}, {pipeline_mode = #tpu.pipeline_mode<synchronous>, transform_indices = @transform_4, window_bounds = array<i64: 1, 128>}, {pipeline_mode = #tpu.pipeline_mode<synchronous>, transform_indices = @transform_5, window_bounds = array<i64: 128, 256>}, {pipeline_mode = #tpu.pipeline_mode<synchronous>, transform_indices = @transform_6, window_bounds = array<i64: 1, 256>}, {transform_indices = @transform_7, window_bounds = array<i64: 1, 1, 16, 256>}]} {
    %c0_i32 = arith.constant 0 : i32
    %0 = arith.cmpi eq, %arg2, %c0_i32 : i32
    %1 = arith.extui %0 : i1 to i32
    %c0_i32_0 = arith.constant 0 : i32
    %2 = arith.cmpi ne, %1, %c0_i32_0 : i32
    scf.if %2 {
      %cst_29 = arith.constant 0xFF800000 : f32
      %36 = vector.broadcast %cst_29 : f32 to vector<16x256xf32>
      %c0_30 = arith.constant 0 : index
      %c0_31 = arith.constant 0 : index
      %c0_32 = arith.constant 0 : index
      %c0_33 = arith.constant 0 : index
      %37 = vector.load %arg10[%c0_30, %c0_31, %c0_32, %c0_33] : memref<1x1x16x256xf32, #tpu.memory_space<vmem>>, vector<1x1x16x256xf32>
      %38 = vector.shape_cast %37 : vector<1x1x16x256xf32> to vector<16x256xf32>
      %39 = vector.shape_cast %36 : vector<16x256xf32> to vector<1x1x16x256xf32>
      tpu.vector_store %arg10[%c0_30, %c0_31, %c0_32, %c0_33], %39 {strides = array<i32>} : memref<1x1x16x256xf32, #tpu.memory_space<vmem>>, vector<1x1x16x256xf32>,
    } else {
    }
    %c0 = arith.constant 0 : index
    %c0_1 = arith.constant 0 : index
    %c0_2 = arith.constant 0 : index
    %3 = vector.load %arg3[%c0, %c0_1, %c0_2] : memref<1x64x8xbf16, #tpu.memory_space<vmem>>, vector<1x64x8xbf16>
    %4 = vector.shape_cast %3 : vector<1x64x8xbf16> to vector<64x8xbf16>
    %c0_3 = arith.constant 0 : index
    %c0_4 = arith.constant 0 : index
    %5 = vector.load %arg4[%c0_3, %c0_4] : memref<8x64xbf16, #tpu.memory_space<vmem>>, vector<8x64xbf16>
    %cst = arith.constant dense<0.000000e+00> : vector<64x64xf32>
    %6 = tpu.matmul %4, %5, %cst {dimension_numbers = #tpu.dot_dimension_numbers<[1], [0], [0], [1], [0, 0, 1, 1], [], []>} : vector<64x8xbf16>, vector<8x64xbf16>, vector<64x64xf32> -> vector<64x64xf32>
    %c0_5 = arith.constant 0 : index
    %c0_6 = arith.constant 0 : index
    %7 = vector.load %arg5[%c0_5, %c0_6] : memref<1x64xf32, #tpu.memory_space<vmem>>, vector<1x64xf32>
    %8 = vector.broadcast %7 : vector<1x64xf32> to vector<64x64xf32>
    %9 = arith.addf %6, %8 : vector<64x64xf32>
    %cst_7 = arith.constant 0.000000e+00 : f32
    %10 = vector.broadcast %cst_7 : f32 to vector<64x64xf32>
    %11 = arith.maximumf %9, %10 : vector<64x64xf32>
    %12 = arith.truncf %11 : vector<64x64xf32> to vector<64x64xbf16>
    %c0_8 = arith.constant 0 : index
    %c0_9 = arith.constant 0 : index
    %13 = vector.load %arg6[%c0_8, %c0_9] : memref<64x128xbf16, #tpu.memory_space<vmem>>, vector<64x128xbf16>
    %cst_10 = arith.constant dense<0.000000e+00> : vector<64x128xf32>
    %14 = tpu.matmul %12, %13, %cst_10 {dimension_numbers = #tpu.dot_dimension_numbers<[1], [0], [0], [1], [0, 0, 1, 1], [], []>} : vector<64x64xbf16>, vector<64x128xbf16>, vector<64x128xf32> -> vector<64x128xf32>
    %c0_11 = arith.constant 0 : index
    %c0_12 = arith.constant 0 : index
    %15 = vector.load %arg7[%c0_11, %c0_12] : memref<1x128xf32, #tpu.memory_space<vmem>>, vector<1x128xf32>
    %16 = vector.broadcast %15 : vector<1x128xf32> to vector<64x128xf32>
    %17 = arith.addf %14, %16 : vector<64x128xf32>
    %cst_13 = arith.constant 0.000000e+00 : f32
    %18 = vector.broadcast %cst_13 : f32 to vector<64x128xf32>
    %19 = arith.maximumf %17, %18 : vector<64x128xf32>
    %20 = arith.truncf %19 : vector<64x128xf32> to vector<64x128xbf16>
    %c0_14 = arith.constant 0 : index
    %c0_15 = arith.constant 0 : index
    %21 = vector.load %arg8[%c0_14, %c0_15] : memref<128x256xbf16, #tpu.memory_space<vmem>>, vector<128x256xbf16>
    %cst_16 = arith.constant dense<0.000000e+00> : vector<64x256xf32>
    %22 = tpu.matmul %20, %21, %cst_16 {dimension_numbers = #tpu.dot_dimension_numbers<[1], [0], [0], [1], [0, 0, 1, 1], [], []>} : vector<64x128xbf16>, vector<128x256xbf16>, vector<64x256xf32> -> vector<64x256xf32>
    %c0_17 = arith.constant 0 : index
    %c0_18 = arith.constant 0 : index
    %23 = vector.load %arg9[%c0_17, %c0_18] : memref<1x256xf32, #tpu.memory_space<vmem>>, vector<1x256xf32>
    %24 = vector.broadcast %23 : vector<1x256xf32> to vector<64x256xf32>
    %25 = arith.addf %22, %24 : vector<64x256xf32>
    %cst_19 = arith.constant 0.000000e+00 : f32
    %26 = vector.broadcast %cst_19 : f32 to vector<64x256xf32>
    %27 = arith.maximumf %25, %26 : vector<64x256xf32>
    %28 = vector.shape_cast %27 : vector<64x256xf32> to vector<4x16x256xf32>
    %cst_20 = arith.constant dense<0xFF800000> : vector<16x256xf32>
    %29 = vector.multi_reduction <maximumf>, %28, %cst_20 [0] : vector<4x16x256xf32> to vector<16x256xf32>
    %c0_21 = arith.constant 0 : index
    %c0_22 = arith.constant 0 : index
    %c0_23 = arith.constant 0 : index
    %c0_24 = arith.constant 0 : index
    %30 = vector.load %arg10[%c0_21, %c0_22, %c0_23, %c0_24] : memref<1x1x16x256xf32, #tpu.memory_space<vmem>>, vector<1x1x16x256xf32>
    %31 = vector.shape_cast %30 : vector<1x1x16x256xf32> to vector<16x256xf32>
    %32 = arith.maximumf %31, %29 : vector<16x256xf32>
    %c0_25 = arith.constant 0 : index
    %c0_26 = arith.constant 0 : index
    %c0_27 = arith.constant 0 : index
    %c0_28 = arith.constant 0 : index
    %33 = vector.load %arg10[%c0_25, %c0_26, %c0_27, %c0_28] : memref<1x1x16x256xf32, #tpu.memory_space<vmem>>, vector<1x1x16x256xf32>
    %34 = vector.shape_cast %33 : vector<1x1x16x256xf32> to vector<16x256xf32>
    %35 = vector.shape_cast %32 : vector<16x256xf32> to vector<1x1x16x256xf32>
    tpu.vector_store %arg10[%c0_25, %c0_26, %c0_27, %c0_28], %35 {strides = array<i32>} : memref<1x1x16x256xf32, #tpu.memory_space<vmem>>, vector<1x1x16x256xf32>,
    return
  }
  func.func @transform_0(%arg0: i32, %arg1: i32, %arg2: i32) -> (i32, i32, i32) {
    %c1_i32 = arith.constant 1 : i32
    %0 = arith.muli %arg0, %c1_i32 : i32
    %1 = arith.addi %0, %arg2 : i32
    %c0_i32 = arith.constant 0 : i32
    %c0_i32_0 = arith.constant 0 : i32
    return %arg1, %1, %c0_i32 : i32, i32, i32
  }
  func.func @transform_1(%arg0: i32, %arg1: i32, %arg2: i32) -> (i32, i32) {
    %c0_i32 = arith.constant 0 : i32
    %c0_i32_0 = arith.constant 0 : i32
    %c0_i32_1 = arith.constant 0 : i32
    return %c0_i32, %c0_i32_0 : i32, i32
  }
  func.func @transform_2(%arg0: i32, %arg1: i32, %arg2: i32) -> (i32, i32) {
    %c0_i32 = arith.constant 0 : i32
    %c0_i32_0 = arith.constant 0 : i32
    %c0_i32_1 = arith.constant 0 : i32
    return %c0_i32, %c0_i32_0 : i32, i32
  }
  func.func @transform_3(%arg0: i32, %arg1: i32, %arg2: i32) -> (i32, i32) {
    %c0_i32 = arith.constant 0 : i32
    %c0_i32_0 = arith.constant 0 : i32
    %c0_i32_1 = arith.constant 0 : i32
    return %c0_i32, %c0_i32_0 : i32, i32
  }
  func.func @transform_4(%arg0: i32, %arg1: i32, %arg2: i32) -> (i32, i32) {
    %c0_i32 = arith.constant 0 : i32
    %c0_i32_0 = arith.constant 0 : i32
    %c0_i32_1 = arith.constant 0 : i32
    return %c0_i32, %c0_i32_0 : i32, i32
  }
  func.func @transform_5(%arg0: i32, %arg1: i32, %arg2: i32) -> (i32, i32) {
    %c0_i32 = arith.constant 0 : i32
    %c0_i32_0 = arith.constant 0 : i32
    %c0_i32_1 = arith.constant 0 : i32
    return %c0_i32, %c0_i32_0 : i32, i32
  }
  func.func @transform_6(%arg0: i32, %arg1: i32, %arg2: i32) -> (i32, i32) {
    %c0_i32 = arith.constant 0 : i32
    %c0_i32_0 = arith.constant 0 : i32
    %c0_i32_1 = arith.constant 0 : i32
    return %c0_i32, %c0_i32_0 : i32, i32
  }
  func.func @transform_7(%arg0: i32, %arg1: i32, %arg2: i32) -> (i32, i32, i32, i32) {
    %c0_i32 = arith.constant 0 : i32
    %c0_i32_0 = arith.constant 0 : i32
    %c0_i32_1 = arith.constant 0 : i32
    return %arg0, %arg1, %c0_i32, %c0_i32_0 : i32, i32, i32, i32
  }
}

</mosaic_0001>

<llo_original>
// kernel: tpu_custom_call.1
$region0: #{tpu_custom_call.1}
  #allocation0 [shape = 'u32[]', space=smem, size = 0x4, offset = 0x4, fixed_abs, tag = 'smem constant byte address 0x4 - core index']
  #allocation1 [shape = 'u32[72,128]{1,0:T(1,128)}', space=vmem, size = 0x9000, scoped, tag = 'internal scratch']
  %s0 = inlined_call_operand.vmem [shape: bf16[2,64,8], index: 0, kind: input, shape index: {}]
  %s1 = inlined_call_operand.vmem [shape: bf16[8,64], index: 1, kind: input, shape index: {}]
  %s2 = inlined_call_operand.vmem [shape: f32[1,64], index: 2, kind: input, shape index: {}]
  %s3 = inlined_call_operand.vmem [shape: bf16[64,128], index: 3, kind: input, shape index: {}]
  %s4 = inlined_call_operand.vmem [shape: f32[1,128], index: 4, kind: input, shape index: {}]
  %s5 = inlined_call_operand.hbm [shape: bf16[128,256], index: 5, kind: input, shape index: {}]
  %s6 = inlined_call_operand.vmem [shape: f32[1,256], index: 6, kind: input, shape index: {}]
  %s7 = inlined_call_operand.hbm [shape: f32[1,2,16,256], index: 7, kind: output, shape index: {}]
  %s8 = sld [smem:[#allocation0]]
  $region69: #{tpu_custom_call.1} parent=0
    _
  %s10 = ssub.s32 1, %s8
  %s11 = scalar_select 0, %s10, %s8
  $region1: #{tpu_custom_call.1} parent=0
    #allocation2 [shape = 'u8[65536]{0}', space=vmem, size = 0x10000, scoped, tag = 'input window, operand 5, single buffered']
    #allocation3 [shape = 's32[2]{0}', space=sflag, size = 0x8, scoped, tag = 'scoped memory for tpu_custom_call.1']
    #allocation4 [shape = 's32[2]{0}', space=sflag, size = 0x8, scoped, tag = 'scoped memory for tpu_custom_call.1']
    #allocation5 [shape = 'u8[32768]{0}', space=vmem, size = 0x8000, scoped, tag = 'output window, operand 0']
    %12 = vsyncpa [#allocation3], 0
    %13 = vsyncpa [#allocation4], 0
    %s14 = scalar_lea.sflag [#allocation4], 1
    %15 = vsyncpa %s14, 0
    loop: start=0, step=1, limit=4
    $region2: #{tpu_custom_call.1} parent=1 // loop_pre_header
      _
    $region3: #{tpu_custom_call.1} parent=1 // loop_header
      %s17 = sphi 0, %s21
      %p18 = scmp.ge.s32.totalorder %s17, 4
      %s24 = sphi 0, %s43
      %s25 = sphi 0, %s39
      %s26 = sphi 0, %s35
      %s27 = sphi 0, %s24
      %s28 = sphi 0, %s25
      %s29 = sphi 0, %s26
      %s30 = sphi 0, %s27
      %s31 = sphi 0, %s28
      %s32 = sphi 0, %s29
      %s50 = sphi 0, %s52
      %s53 = sphi 0, %s50
      %s54 = sphi 0, %s53
      %s70 = sphi 0, %s54
      %s74 = sphi 0, %s74
      %s76 = sphi 0, %s74
      %s77 = sphi 0, %s76
      %s91 = sphi 0, %s77
      %s95 = sphi 0, %s95
      %s97 = sphi 0, %s95
      %s98 = sphi 0, %s97
      %s112 = sphi 0, %s98
      %s116 = sphi 0, %s116
      %s118 = sphi 0, %s116
      %s119 = sphi 0, %s118
      %s133 = sphi 0, %s119
      %s137 = sphi 0, %s137
      %s139 = sphi 0, %s137
      %s140 = sphi 0, %s139
      %s154 = sphi 0, %s140
      %s158 = sphi 0, %s158
      %s160 = sphi 0, %s158
      %s161 = sphi 0, %s160
      %s175 = sphi 0, %s161
      %s179 = sphi 0, %s179
      %s181 = sphi 0, %s179
      %s182 = sphi 0, %s181
      %s196 = sphi 0, %s182
      %s204 = sphi 0, %s206
      %s207 = sphi 0, %s204
      %s208 = sphi 0, %s207
      %s224 = sphi 0, %s208
    $region4: #{tpu_custom_call.1} parent=1 // loop_header_branch
      %20 = sbr.rel (%p18) target = $region8
    $region5: #{tpu_custom_call.1} parent=1 // loop_body
      %s22 = ssub.s32 %s17, 1
      %s23 = ssub.s32 %s17, 2
      %s33 = sadd.s32 1, %s26
      %p34 = scmp.ge.s32.totalorder %s33, 1
      %s35 = scalar_select %p34, 0, %s33
      %s36 = sadd.s32 1, %s25
      %s37 = scalar_select %p34, %s36, %s25
      %p38 = scmp.ge.s32.totalorder %s37, 2
      %s39 = scalar_select %p38, 0, %s37
      %s40 = sadd.s32 1, %s24
      %s41 = scalar_select %p38, %s40, %s24
      %p42 = scmp.ge.s32.totalorder %s41, 1
      %s43 = scalar_select %p42, 0, %s41
      %s44 = sadd.s32 %s24, %s26
      %s45 = sadd.s32 %s43, %s35
      %s46 = ssub.s32 %s25, %s39
      %s47 = ssub.s32 %s44, %s45
      %s48 = sor.u32 %s46, %s47
      %p49 = scmp.eq.s32.totalorder %s48, 0
      %s51 = sadd.s32 %s50, 1
      %s52 = scalar_select %p49, %s50, %s51
      %p55 = pneg %p49
      %p56 = scmp.eq.s32.totalorder %s17, 1
      %p57 = por %p55, %p56
      %p58 = scmp.ne.s32.totalorder %s50, %s53
      %p59 = scmp.eq.s32.totalorder %s17, 0
      %p60 = por %p58, %p59
      %p61 = scmp.ne.s32.totalorder %s50, %s53
      %p62 = scmp.eq.s32.totalorder %s22, 1
      %p63 = por %p61, %p62
      %p64 = scmp.ne.s32.totalorder %s53, %s54
      %p65 = scmp.eq.s32.totalorder %s22, 0
      %p66 = por %p64, %p65
      %p67 = scmp.ne.s32.totalorder %s53, %s54
      %p68 = scmp.eq.s32.totalorder %s23, 1
      %p69 = por %p67, %p68
      %p71 = scmp.ne.s32.totalorder %s54, %s70
      %p72 = scmp.eq.s32.totalorder %s23, 0
      %p73 = por %p71, %p72
      %s75 = sadd.s32 %s74, 1
      %p78 = scmp.eq.s32.totalorder %s17, 1
      %p79 = scmp.ne.s32.totalorder %s74, %s76
      %p80 = scmp.eq.s32.totalorder %s17, 0
      %p81 = por %p79, %p80
      %p82 = scmp.ne.s32.totalorder %s74, %s76
      %p83 = scmp.eq.s32.totalorder %s22, 1
      %p84 = por %p82, %p83
      %p85 = scmp.ne.s32.totalorder %s76, %s77
      %p86 = scmp.eq.s32.totalorder %s22, 0
      %p87 = por %p85, %p86
      %p88 = scmp.ne.s32.totalorder %s76, %s77
      %p89 = scmp.eq.s32.totalorder %s23, 1
      %p90 = por %p88, %p89
      %p92 = scmp.ne.s32.totalorder %s77, %s91
      %p93 = scmp.eq.s32.totalorder %s23, 0
      %p94 = por %p92, %p93
      %s96 = sadd.s32 %s95, 1
      %p99 = scmp.eq.s32.totalorder %s17, 1
      %p100 = scmp.ne.s32.totalorder %s95, %s97
      %p101 = scmp.eq.s32.totalorder %s17, 0
      %p102 = por %p100, %p101
      %p103 = scmp.ne.s32.totalorder %s95, %s97
      %p104 = scmp.eq.s32.totalorder %s22, 1
      %p105 = por %p103, %p104
      %p106 = scmp.ne.s32.totalorder %s97, %s98
      %p107 = scmp.eq.s32.totalorder %s22, 0
      %p108 = por %p106, %p107
      %p109 = scmp.ne.s32.totalorder %s97, %s98
      %p110 = scmp.eq.s32.totalorder %s23, 1
      %p111 = por %p109, %p110
      %p113 = scmp.ne.s32.totalorder %s98, %s112
      %p114 = scmp.eq.s32.totalorder %s23, 0
      %p115 = por %p113, %p114
      %s117 = sadd.s32 %s116, 1
      %p120 = scmp.eq.s32.totalorder %s17, 1
      %p121 = scmp.ne.s32.totalorder %s116, %s118
      %p122 = scmp.eq.s32.totalorder %s17, 0
      %p123 = por %p121, %p122
      %p124 = scmp.ne.s32.totalorder %s116, %s118
      %p125 = scmp.eq.s32.totalorder %s22, 1
      %p126 = por %p124, %p125
      %p127 = scmp.ne.s32.totalorder %s118, %s119
      %p128 = scmp.eq.s32.totalorder %s22, 0
      %p129 = por %p127, %p128
      %p130 = scmp.ne.s32.totalorder %s118, %s119
      %p131 = scmp.eq.s32.totalorder %s23, 1
      %p132 = por %p130, %p131
      %p134 = scmp.ne.s32.totalorder %s119, %s133
      %p135 = scmp.eq.s32.totalorder %s23, 0
      %p136 = por %p134, %p135
      %s138 = sadd.s32 %s137, 1
      %p141 = scmp.eq.s32.totalorder %s17, 1
      %p142 = scmp.ne.s32.totalorder %s137, %s139
      %p143 = scmp.eq.s32.totalorder %s17, 0
      %p144 = por %p142, %p143
      %p145 = scmp.ne.s32.totalorder %s137, %s139
      %p146 = scmp.eq.s32.totalorder %s22, 1
      %p147 = por %p145, %p146
      %p148 = scmp.ne.s32.totalorder %s139, %s140
      %p149 = scmp.eq.s32.totalorder %s22, 0
      %p150 = por %p148, %p149
      %p151 = scmp.ne.s32.totalorder %s139, %s140
      %p152 = scmp.eq.s32.totalorder %s23, 1
      %p153 = por %p151, %p152
      %p155 = scmp.ne.s32.totalorder %s140, %s154
      %p156 = scmp.eq.s32.totalorder %s23, 0
      %p157 = por %p155, %p156
      %s159 = sadd.s32 %s158, 1
      %p162 = scmp.eq.s32.totalorder %s17, 1
      %p163 = scmp.ne.s32.totalorder %s158, %s160
      %p164 = scmp.eq.s32.totalorder %s17, 0
      %p165 = por %p163, %p164
      %p166 = scmp.ne.s32.totalorder %s158, %s160
      %p167 = scmp.eq.s32.totalorder %s22, 1
      %p168 = por %p166, %p167
      %p169 = scmp.ne.s32.totalorder %s160, %s161
      %p170 = scmp.eq.s32.totalorder %s22, 0
      %p171 = por %p169, %p170
      %p172 = scmp.ne.s32.totalorder %s160, %s161
      %p173 = scmp.eq.s32.totalorder %s23, 1
      %p174 = por %p172, %p173
      %p176 = scmp.ne.s32.totalorder %s161, %s175
      %p177 = scmp.eq.s32.totalorder %s23, 0
      %p178 = por %p176, %p177
      %s180 = sadd.s32 %s179, 1
      %p183 = scmp.eq.s32.totalorder %s17, 1
      %p184 = scmp.ne.s32.totalorder %s179, %s181
      %p185 = scmp.eq.s32.totalorder %s17, 0
      %p186 = por %p184, %p185
      %p187 = scmp.ne.s32.totalorder %s179, %s181
      %p188 = scmp.eq.s32.totalorder %s22, 1
      %p189 = por %p187, %p188
      %p190 = scmp.ne.s32.totalorder %s181, %s182
      %p191 = scmp.eq.s32.totalorder %s22, 0
      %p192 = por %p190, %p191
      %p193 = scmp.ne.s32.totalorder %s181, %s182
      %p194 = scmp.eq.s32.totalorder %s23, 1
      %p195 = por %p193, %p194
      %p197 = scmp.ne.s32.totalorder %s182, %s196
      %p198 = scmp.eq.s32.totalorder %s23, 0
      %p199 = por %p197, %p198
      %s200 = ssub.s32 %s24, %s43
      %s201 = ssub.s32 %s25, %s39
      %s202 = sor.u32 %s200, %s201
      %p203 = scmp.eq.s32.totalorder %s202, 0
      %s205 = sadd.s32 %s204, 1
      %s206 = scalar_select %p203, %s204, %s205
      %p209 = pneg %p203
      %p210 = scmp.eq.s32.totalorder %s17, 1
      %p211 = por %p209, %p210
      %p212 = scmp.ne.s32.totalorder %s204, %s207
      %p213 = scmp.eq.s32.totalorder %s17, 0
      %p214 = por %p212, %p213
      %p215 = scmp.ne.s32.totalorder %s204, %s207
      %p216 = scmp.eq.s32.totalorder %s22, 1
      %p217 = por %p215, %p216
      %p218 = scmp.ne.s32.totalorder %s207, %s208
      %p219 = scmp.eq.s32.totalorder %s22, 0
      %p220 = por %p218, %p219
      %p221 = scmp.ne.s32.totalorder %s207, %s208
      %p222 = scmp.eq.s32.totalorder %s23, 1
      %p223 = por %p221, %p222
      %p225 = scmp.ne.s32.totalorder %s208, %s224
      %p226 = scmp.eq.s32.totalorder %s23, 0
      %p227 = por %p225, %p226
      %p228 = scmp.le.s32.totalorder 1, %s17
      %p229 = scmp.lt.s32.totalorder %s17, 3
      %p230 = pnand %p228, %p229
      %p231 = pneg %p230
      // Predicated region
      $region9: #{tpu_custom_call.1} parent=5 // pred_check
        _
      $region10: #{tpu_custom_call.1} parent=5 // pred_check_branch
        %233 = sbr.rel (%p230) target = $region12
      $region11: #{tpu_custom_call.1} parent=5 // pred_region
        %s234 = ssub.s32 %s17, 1
        // Predicated region
        $region13: #{tpu_custom_call.1} parent=11 // pred_check
          %p235 = pneg %p87
        $region14: #{tpu_custom_call.1} parent=11 // pred_check_branch
          %237 = sbr.rel (%p235) target = $region16
        $region15: #{tpu_custom_call.1} parent=11 // pred_region
          _
        $region16: #{tpu_custom_call.1} parent=11 // pred_fallthru
          _
        // Predicated region
        $region17: #{tpu_custom_call.1} parent=11 // pred_check
          %p238 = pneg %p108
        $region18: #{tpu_custom_call.1} parent=11 // pred_check_branch
          %240 = sbr.rel (%p238) target = $region20
        $region19: #{tpu_custom_call.1} parent=11 // pred_region
          _
        $region20: #{tpu_custom_call.1} parent=11 // pred_fallthru
          _
        // Predicated region
        $region21: #{tpu_custom_call.1} parent=11 // pred_check
          %p241 = pneg %p129
        $region22: #{tpu_custom_call.1} parent=11 // pred_check_branch
          %243 = sbr.rel (%p241) target = $region24
        $region23: #{tpu_custom_call.1} parent=11 // pred_region
          _
        $region24: #{tpu_custom_call.1} parent=11 // pred_fallthru
          _
        // Predicated region
        $region25: #{tpu_custom_call.1} parent=11 // pred_check
          %p244 = pneg %p150
        $region26: #{tpu_custom_call.1} parent=11 // pred_check_branch
          %246 = sbr.rel (%p244) target = $region28
        $region27: #{tpu_custom_call.1} parent=11 // pred_region
          _
        $region28: #{tpu_custom_call.1} parent=11 // pred_fallthru
          _
        // Predicated region
        $region29: #{tpu_custom_call.1} parent=11 // pred_check
          %p247 = pneg %p171
        $region30: #{tpu_custom_call.1} parent=11 // pred_check_branch
          %249 = sbr.rel (%p247) target = $region32
        $region31: #{tpu_custom_call.1} parent=11 // pred_region
          %251 = vsyncadd [#allocation3], 0
          %s252 = sshll.u32 %s5, 4
          %s253 = int_to_ptr.hbm [resolvable:$true] %s252
          %s254 = sshll.u32 [#allocation2], 4
          %s255 = int_to_ptr.vmem [resolvable:$true] %s254
          %260 = dma.hbm_to_vmem [thread:$0]  %s253, 2048, %s255, [#allocation3], 128, 128, 8
        $region32: #{tpu_custom_call.1} parent=11 // pred_fallthru
          _
        // Predicated region
        $region33: #{tpu_custom_call.1} parent=11 // pred_check
          %p261 = pneg %p192
        $region34: #{tpu_custom_call.1} parent=11 // pred_check_branch
          %263 = sbr.rel (%p261) target = $region36
        $region35: #{tpu_custom_call.1} parent=11 // pred_region
          _
        $region36: #{tpu_custom_call.1} parent=11 // pred_fallthru
          _
      $region12: #{tpu_custom_call.1} parent=5 // pred_fallthru
        _
      %p264 = scmp.lt.s32.totalorder %s17, 2
      // Predicated region
      $region37: #{tpu_custom_call.1} parent=5 // pred_check
        %p265 = pneg %p264
      $region38: #{tpu_custom_call.1} parent=5 // pred_check_branch
        %267 = sbr.rel (%p265) target = $region40
      $region39: #{tpu_custom_call.1} parent=5 // pred_region
        // Predicated region
        $region41: #{tpu_custom_call.1} parent=39 // pred_check
          %p268 = pneg %p60
        $region42: #{tpu_custom_call.1} parent=39 // pred_check_branch
          %270 = sbr.rel (%p268) target = $region44
        $region43: #{tpu_custom_call.1} parent=39 // pred_region
          %s271 = sadd.s32 %s24, %s26
          %s272 = smul.u32 8, %s271
          %p273 = scmp.lt.s32.totalorder %s25, 1
          %s274 = scalar_select %p273, %s25, 1
          %p275 = scmp.lt.s32.totalorder %s272, 7
          %s276 = scalar_select %p275, %s272, 7
          %s277 = smul.addr %s274, 8
          %s278 = sadd.s32 %s276, %s277
          %s279 = smul.addr %s278, 4
          %s280 = scalar_lea.vmem %s0, %s279
          %s281 = sadd.s32 %s24, %s26
          %s282 = smul.u32 8, %s281
        $region44: #{tpu_custom_call.1} parent=39 // pred_fallthru
          _
      $region40: #{tpu_custom_call.1} parent=5 // pred_fallthru
        _
      %p283 = scmp.le.s32.totalorder 1, %s17
      %p284 = scmp.lt.s32.totalorder %s17, 3
      %p285 = pnand %p283, %p284
      %p286 = pneg %p285
      // Predicated region
      $region45: #{tpu_custom_call.1} parent=5 // pred_check
        _
      $region46: #{tpu_custom_call.1} parent=5 // pred_check_branch
        %288 = sbr.rel (%p285) target = $region48
      $region47: #{tpu_custom_call.1} parent=5 // pred_region
        %s289 = ssub.s32 %s17, 1
        // Predicated region
        $region49: #{tpu_custom_call.1} parent=47 // pred_check
          %p290 = pneg %p171
        $region50: #{tpu_custom_call.1} parent=47 // pred_check_branch
          %292 = sbr.rel (%p290) target = $region52
        $region51: #{tpu_custom_call.1} parent=47 // pred_region
          %294 = dma.done [#allocation3], 2048
        $region52: #{tpu_custom_call.1} parent=47 // pred_fallthru
          _
        %s295 = sadd.s32 %s27, %s29
        %s296 = smul.u32 8, %s295
        %p297 = scmp.lt.s32.totalorder %s28, 1
        %s298 = scalar_select %p297, %s28, 1
        %p299 = scmp.lt.s32.totalorder %s296, 7
        %s300 = scalar_select %p299, %s296, 7
        %s301 = smul.addr %s298, 8
        %s302 = sadd.s32 %s300, %s301
        %s303 = smul.addr %s302, 4
        %s304 = scalar_lea.vmem %s0, %s303
        %p305 = pneg %p66
        %p306 = pneg %p63
        %p307 = pneg %p87
        %p308 = pneg %p84
        %p309 = pneg %p108
        %p310 = pneg %p105
        %p311 = pneg %p129
        %p312 = pneg %p126
        %p313 = pneg %p150
        %p314 = pneg %p147
        %p315 = pneg %p171
        %p316 = pneg %p168
        %p317 = pneg %p192
        %p318 = pneg %p189
        %p319 = pneg %p220
        %p320 = pneg %p217
        %s321 = sand.u32 %s207, 1
        %s322 = scalar_lea.sflag [#allocation4], %s321
        %s323 = sand.u32 %s207, 1
        %s324 = smul.addr %s323, 32
        %s325 = scalar_lea.vmem [#allocation5], %s324
        %s326 = sadd.s32 %s27, %s29
        %s327 = smul.u32 8, %s326
        %p328 = scmp.lt.s32.totalorder %s28, 1
        %s329 = scalar_select %p328, %s28, 1
        %p330 = scmp.lt.s32.totalorder %s327, 7
        %s331 = scalar_select %p330, %s327, 7
        %s332 = smul.addr %s329, 8
        %s333 = sadd.s32 %s331, %s332
        %s334 = smul.addr %s333, 4
        %s335 = scalar_lea.vmem %s0, %s334
        %s336 = sadd.s32 %s27, %s29
        %s337 = smul.u32 8, %s336
        %p339 = scmp.eq.s32.totalorder %s29, 0
        // Predicated region
        $region53: #{tpu_custom_call.1} parent=47 // pred_check
          %p340 = pneg %p339
        $region54: #{tpu_custom_call.1} parent=47 // pred_check_branch
          %342 = sbr.rel (%p340) target = $region56
        $region55: #{tpu_custom_call.1} parent=47 // pred_region
          %343 = vst [vmem:[%s325] sm:$0xff] -inf
          %344 = vst [vmem:[%s325 + $0x8] sm:$0xff] -inf
          %345 = vst [vmem:[%s325 + $0x10] sm:$0xff] -inf
          %346 = vst [vmem:[%s325 + $0x18] sm:$0xff] -inf
        $region56: #{tpu_custom_call.1} parent=47 // pred_fallthru
          _
        %v347 = vld [vmem:[%s335] sm:$0xf]
        %v348 = vld [vmem:[%s335 + $0x4] sm:$0xf]
        %v349 = vld [vmem:[%s335 + $0x8] sm:$0xf]
        %v350 = vld [vmem:[%s335 + $0xc] sm:$0xf]
        %v351 = vld [vmem:[%s335 + $0x10] sm:$0xf]
        %v352 = vld [vmem:[%s335 + $0x14] sm:$0xf]
        %v353 = vld [vmem:[%s335 + $0x18] sm:$0xf]
        %v354 = vld [vmem:[%s335 + $0x1c] sm:$0xf]
        %v355 = vld [vmem:[%s1] sm:$0xf]
        %v356 = vld [vmem:[%s2] sm:$0x1]
        %v358 = vperm.slane %v356, 0
        %v368 = vunpack.c.l.b16 %v347
        %v369 = vunpack.c.l.b16 %v348
        %v370 = vunpack.c.l.b16 %v349
        %v371 = vunpack.c.l.b16 %v350
        %v372 = vunpack.c.l.b16 %v351
        %v373 = vunpack.c.l.b16 %v352
        %v374 = vunpack.c.l.b16 %v353
        %v375 = vunpack.c.l.b16 %v354
        %v376 = vpack.c.b16 %v369, %v368
        %v377 = vpack.c.b16 %v371, %v370
        %v378 = vpack.c.b16 %v373, %v372
        %v379 = vpack.c.b16 %v375, %v374
        %vm380 = vcmask 64512
        %v382 = vsel %vm380, %v376, 0
        %v385 = vsel %vm380, %v377, 0
        %v388 = vsel %vm380, %v378, 0
        %v391 = vsel %vm380, %v379, 0
        %vm393 = vcmask 1043456
        %v395 = vsel %vm393, %v355, 0
        %397 = vmatpush.bf16.msra.mxu0 0
        %398 = vmatpush.bf16.msra.mxu0 0
        %399 = vmatpush.bf16.msra.mxu0 0
        %400 = vmatpush.bf16.msra.mxu0 0
        %401 = vmatpush.bf16.msra.mxu0 0
        %402 = vmatpush.bf16.msra.mxu0 0
        %403 = vmatpush.bf16.msra.mxu0 0
        %404 = vmatpush.bf16.msra.mxu0 %v395
        %405 = vmatmul.bf16.gmra.mxu0 %v382
        %v406 = vpop.f32.mrf.mxu0
        %v407 = vadd.f32 %v358, %v406
        %v408 = vpop.f32.mrf.mxu0
        %v409 = vadd.f32 %v358, %v408
        %410 = vmatmul.bf16.gmra.mxu0 %v385
        %v411 = vpop.f32.mrf.mxu0
        %v412 = vadd.f32 %v358, %v411
        %v413 = vpop.f32.mrf.mxu0
        %v414 = vadd.f32 %v358, %v413
        %415 = vmatmul.bf16.gmra.mxu0 %v388
        %v416 = vpop.f32.mrf.mxu0
        %v417 = vadd.f32 %v358, %v416
        %v418 = vpop.f32.mrf.mxu0
        %v419 = vadd.f32 %v358, %v418
        %420 = vmatmul.bf16.gmra.mxu0 %v391
        %v421 = vpop.f32.mrf.mxu0
        %v422 = vadd.f32 %v358, %v421
        %v423 = vpop.f32.mrf.mxu0
        %v424 = vadd.f32 %v358, %v423
        %425 = vdwg.mxu0
        %v426 = vmax.f32 %v407, 0.0
        %v427 = vmax.f32 %v409, 0.0
        %v428 = vmax.f32 %v412, 0.0
        %v429 = vmax.f32 %v414, 0.0
        %v430 = vmax.f32 %v417, 0.0
        %v431 = vmax.f32 %v419, 0.0
        %v432 = vmax.f32 %v422, 0.0
        %v433 = vmax.f32 %v424, 0.0
        %v434 = vpack.c.bf16 %v427, %v426
        %v435 = vpack.c.bf16 %v429, %v428
        %v436 = vpack.c.bf16 %v431, %v430
        %v437 = vpack.c.bf16 %v433, %v432
        %v438 = vld [vmem:[%s3] sm:$0xf]
        %v439 = vld [vmem:[%s3 + $0x4] sm:$0xf]
        %v440 = vld [vmem:[%s3 + $0x8] sm:$0xf]
        %v441 = vld [vmem:[%s3 + $0xc] sm:$0xf]
        %v442 = vld [vmem:[%s3 + $0x10] sm:$0xf]
        %v443 = vld [vmem:[%s3 + $0x14] sm:$0xf]
        %v444 = vld [vmem:[%s3 + $0x18] sm:$0xf]
        %v445 = vld [vmem:[%s3 + $0x1c] sm:$0xf]
        %v446 = vld [vmem:[%s4] sm:$0x1]
        %v448 = vperm.slane %v446, 0
        %v458 = vunpack.c.l.b16 %v438
        %v459 = vunpack.c.l.b16 %v439
        %v460 = vunpack.c.l.b16 %v440
        %v461 = vunpack.c.l.b16 %v441
        %v462 = vunpack.c.l.b16 %v442
        %v463 = vunpack.c.l.b16 %v443
        %v464 = vunpack.c.l.b16 %v444
        %v465 = vunpack.c.l.b16 %v445
        %v466 = vpack.c.b16 %v459, %v458
        %v467 = vpack.c.b16 %v461, %v460
        %v468 = vpack.c.b16 %v463, %v462
        %v469 = vpack.c.b16 %v465, %v464
        %vm474 = vcmask 523264
        %v476 = vsel %vm474, %v434, 0
        %v479 = vsel %vm474, %v435, 0
        %v482 = vsel %vm474, %v436, 0
        %v485 = vsel %vm474, %v437, 0
        %487 = vmatpush.bf16.msra.mxu0 0
        %488 = vmatpush.bf16.msra.mxu0 0
        %489 = vmatpush.bf16.msra.mxu0 0
        %490 = vmatpush.bf16.msra.mxu0 0
        %491 = vmatpush.bf16.msra.mxu0 %v469
        %492 = vmatpush.bf16.msra.mxu0 %v468
        %493 = vmatpush.bf16.msra.mxu0 %v467
        %494 = vmatpush.bf16.msra.mxu0 %v466
        %495 = vmatmul.bf16.gmra.mxu0 %v476
        %v496 = vpop.f32.mrf.mxu0
        %v497 = vadd.f32 %v448, %v496
        %v498 = vpop.f32.mrf.mxu0
        %v499 = vadd.f32 %v448, %v498
        %500 = vmatmul.bf16.gmra.mxu0 %v479
        %v501 = vpop.f32.mrf.mxu0
        %v502 = vadd.f32 %v448, %v501
        %v503 = vpop.f32.mrf.mxu0
        %v504 = vadd.f32 %v448, %v503
        %505 = vmatmul.bf16.gmra.mxu0 %v482
        %v506 = vpop.f32.mrf.mxu0
        %v507 = vadd.f32 %v448, %v506
        %v508 = vpop.f32.mrf.mxu0
        %v509 = vadd.f32 %v448, %v508
        %510 = vmatmul.bf16.gmra.mxu0 %v485
        %v511 = vpop.f32.mrf.mxu0
        %v512 = vadd.f32 %v448, %v511
        %v513 = vpop.f32.mrf.mxu0
        %v514 = vadd.f32 %v448, %v513
        %515 = vdwg.mxu0
        %v516 = vmax.f32 %v497, 0.0
        %v517 = vmax.f32 %v499, 0.0
        %v518 = vmax.f32 %v502, 0.0
        %v519 = vmax.f32 %v504, 0.0
        %v520 = vmax.f32 %v507, 0.0
        %v521 = vmax.f32 %v509, 0.0
        %v522 = vmax.f32 %v512, 0.0
        %v523 = vmax.f32 %v514, 0.0
        %v524 = vpack.c.bf16 %v517, %v516
        %v525 = vpack.c.bf16 %v519, %v518
        %v526 = vpack.c.bf16 %v521, %v520
        %v527 = vpack.c.bf16 %v523, %v522
        %v528 = vld [vmem:[#allocation2] sm:$0xff]
        %v529 = vld [vmem:[#allocation2 + $0x8] sm:$0xff]
        %v530 = vld [vmem:[#allocation2 + $0x10] sm:$0xff]
        %v531 = vld [vmem:[#allocation2 + $0x18] sm:$0xff]
        %v532 = vld [vmem:[#allocation2 + $0x20] sm:$0xff]
        %v533 = vld [vmem:[#allocation2 + $0x28] sm:$0xff]
        %v534 = vld [vmem:[#allocation2 + $0x30] sm:$0xff]
        %v535 = vld [vmem:[#allocation2 + $0x38] sm:$0xff]
        %v536 = vld [vmem:[#allocation2 + $0x40] sm:$0xff]
        %v537 = vld [vmem:[#allocation2 + $0x48] sm:$0xff]
        %v538 = vld [vmem:[#allocation2 + $0x50] sm:$0xff]
        %v539 = vld [vmem:[#allocation2 + $0x58] sm:$0xff]
        %v540 = vld [vmem:[#allocation2 + $0x60] sm:$0xff]
        %v541 = vld [vmem:[#allocation2 + $0x68] sm:$0xff]
        %v542 = vld [vmem:[#allocation2 + $0x70] sm:$0xff]
        %v543 = vld [vmem:[#allocation2 + $0x78] sm:$0xff]
        %v544 = vld [vmem:[%s6] sm:$0x3]
        %v546 = vperm.slane %v544, 0
        %v547 = vperm.slane %v544, 1
        %v566 = vunpack.c.l.b16 %v528
        %v567 = vunpack.c.h.b16 %v528
        %v568 = vunpack.c.l.b16 %v529
        %v569 = vunpack.c.h.b16 %v529
        %v570 = vunpack.c.l.b16 %v530
        %v571 = vunpack.c.h.b16 %v530
        %v572 = vunpack.c.l.b16 %v531
        %v573 = vunpack.c.h.b16 %v531
        %v574 = vunpack.c.l.b16 %v532
        %v575 = vunpack.c.h.b16 %v532
        %v576 = vunpack.c.l.b16 %v533
        %v577 = vunpack.c.h.b16 %v533
        %v578 = vunpack.c.l.b16 %v534
        %v579 = vunpack.c.h.b16 %v534
        %v580 = vunpack.c.l.b16 %v535
        %v581 = vunpack.c.h.b16 %v535
        %v582 = vunpack.c.l.b16 %v536
        %v583 = vunpack.c.h.b16 %v536
        %v584 = vunpack.c.l.b16 %v537
        %v585 = vunpack.c.h.b16 %v537
        %v586 = vunpack.c.l.b16 %v538
        %v587 = vunpack.c.h.b16 %v538
        %v588 = vunpack.c.l.b16 %v539
        %v589 = vunpack.c.h.b16 %v539
        %v590 = vunpack.c.l.b16 %v540
        %v591 = vunpack.c.h.b16 %v540
        %v592 = vunpack.c.l.b16 %v541
        %v593 = vunpack.c.h.b16 %v541
        %v594 = vunpack.c.l.b16 %v542
        %v595 = vunpack.c.h.b16 %v542
        %v596 = vunpack.c.l.b16 %v543
        %v597 = vunpack.c.h.b16 %v543
        %v598 = vpack.c.b16 %v568, %v566
        %v599 = vpack.c.b16 %v569, %v567
        %v600 = vpack.c.b16 %v572, %v570
        %v601 = vpack.c.b16 %v573, %v571
        %v602 = vpack.c.b16 %v576, %v574
        %v603 = vpack.c.b16 %v577, %v575
        %v604 = vpack.c.b16 %v580, %v578
        %v605 = vpack.c.b16 %v581, %v579
        %v606 = vpack.c.b16 %v584, %v582
        %v607 = vpack.c.b16 %v585, %v583
        %v608 = vpack.c.b16 %v588, %v586
        %v609 = vpack.c.b16 %v589, %v587
        %v610 = vpack.c.b16 %v592, %v590
        %v611 = vpack.c.b16 %v593, %v591
        %v612 = vpack.c.b16 %v596, %v594
        %v613 = vpack.c.b16 %v597, %v595
        %630 = vmatpush.bf16.msra.mxu0 %v612
        %631 = vmatpush.bf16.msra.mxu0 %v610
        %632 = vmatpush.bf16.msra.mxu0 %v608
        %633 = vmatpush.bf16.msra.mxu0 %v606
        %634 = vmatpush.bf16.msra.mxu0 %v604
        %635 = vmatpush.bf16.msra.mxu0 %v602
        %636 = vmatpush.bf16.msra.mxu0 %v600
        %637 = vmatpush.bf16.msra.mxu0 %v598
        %638 = vmatmul.bf16.gmra.mxu0 %v524
        %v639 = vpop.f32.mrf.mxu0
        %v640 = vadd.f32 %v546, %v639
        %v641 = vpop.f32.mrf.mxu0
        %v642 = vadd.f32 %v546, %v641
        %643 = vmatmul.bf16.gmra.mxu0 %v525
        %v644 = vpop.f32.mrf.mxu0
        %v645 = vadd.f32 %v546, %v644
        %v646 = vpop.f32.mrf.mxu0
        %v647 = vadd.f32 %v546, %v646
        %648 = vmatmul.bf16.gmra.mxu0 %v526
        %v649 = vpop.f32.mrf.mxu0
        %v650 = vadd.f32 %v546, %v649
        %v651 = vpop.f32.mrf.mxu0
        %v652 = vadd.f32 %v546, %v651
        %653 = vmatmul.bf16.gmra.mxu0 %v527
        %v654 = vpop.f32.mrf.mxu0
        %v655 = vadd.f32 %v546, %v654
        %v656 = vpop.f32.mrf.mxu0
        %v657 = vadd.f32 %v546, %v656
        %658 = vdwg.mxu0
        %659 = vmatpush.bf16.msra.mxu0 %v613
        %660 = vmatpush.bf16.msra.mxu0 %v611
        %661 = vmatpush.bf16.msra.mxu0 %v609
        %662 = vmatpush.bf16.msra.mxu0 %v607
        %663 = vmatpush.bf16.msra.mxu0 %v605
        %664 = vmatpush.bf16.msra.mxu0 %v603
        %665 = vmatpush.bf16.msra.mxu0 %v601
        %666 = vmatpush.bf16.msra.mxu0 %v599
        %667 = vmatmul.bf16.gmra.mxu0 %v524
        %v668 = vpop.f32.mrf.mxu0
        %v669 = vadd.f32 %v547, %v668
        %v670 = vpop.f32.mrf.mxu0
        %v671 = vadd.f32 %v547, %v670
        %672 = vmatmul.bf16.gmra.mxu0 %v525
        %v673 = vpop.f32.mrf.mxu0
        %v674 = vadd.f32 %v547, %v673
        %v675 = vpop.f32.mrf.mxu0
        %v676 = vadd.f32 %v547, %v675
        %677 = vmatmul.bf16.gmra.mxu0 %v526
        %v678 = vpop.f32.mrf.mxu0
        %v679 = vadd.f32 %v547, %v678
        %v680 = vpop.f32.mrf.mxu0
        %v681 = vadd.f32 %v547, %v680
        %682 = vmatmul.bf16.gmra.mxu0 %v527
        %v683 = vpop.f32.mrf.mxu0
        %v684 = vadd.f32 %v547, %v683
        %v685 = vpop.f32.mrf.mxu0
        %v686 = vadd.f32 %v547, %v685
        %687 = vdwg.mxu0
        %v688 = vmax.f32 %v640, 0.0
        %v689 = vmax.f32 %v669, 0.0
        %v690 = vmax.f32 %v642, 0.0
        %v691 = vmax.f32 %v671, 0.0
        %v692 = vmax.f32 %v645, 0.0
        %v693 = vmax.f32 %v674, 0.0
        %v694 = vmax.f32 %v647, 0.0
        %v695 = vmax.f32 %v676, 0.0
        %v696 = vmax.f32 %v650, 0.0
        %v697 = vmax.f32 %v679, 0.0
        %v698 = vmax.f32 %v652, 0.0
        %v699 = vmax.f32 %v681, 0.0
        %v700 = vmax.f32 %v655, 0.0
        %v701 = vmax.f32 %v684, 0.0
        %v702 = vmax.f32 %v657, 0.0
        %v703 = vmax.f32 %v686, 0.0
        %v704 = vmax.f32 %v688, %v692
        %v705 = vmax.f32 %v704, %v696
        %v706 = vmax.f32 %v705, %v700
        %v707 = vmax.f32 %v689, %v693
        %v708 = vmax.f32 %v707, %v697
        %v709 = vmax.f32 %v708, %v701
        %v710 = vmax.f32 %v690, %v694
        %v711 = vmax.f32 %v710, %v698
        %v712 = vmax.f32 %v711, %v702
        %v713 = vmax.f32 %v691, %v695
        %v714 = vmax.f32 %v713, %v699
        %v715 = vmax.f32 %v714, %v703
        %v716 = vld [vmem:[%s325] sm:$0xff]
        %v717 = vld [vmem:[%s325 + $0x8] sm:$0xff]
        %v718 = vld [vmem:[%s325 + $0x10] sm:$0xff]
        %v719 = vld [vmem:[%s325 + $0x18] sm:$0xff]
        %v720 = vmax.f32 %v716, %v706
        %v721 = vmax.f32 %v717, %v709
        %v722 = vmax.f32 %v718, %v712
        %v723 = vmax.f32 %v719, %v715
        %724 = vst [vmem:[%s325] sm:$0xff] %v720
        %725 = vst [vmem:[%s325 + $0x8] sm:$0xff] %v721
        %726 = vst [vmem:[%s325 + $0x10] sm:$0xff] %v722
        %727 = vst [vmem:[%s325 + $0x18] sm:$0xff] %v723
        %s728 = sand.u32 %s207, 1
        %s729 = scalar_lea.sflag [#allocation4], %s728
        %s730 = sand.u32 %s207, 1
        %s731 = smul.addr %s730, 32
        %s732 = scalar_lea.vmem [#allocation5], %s731
        // Predicated region
        $region57: #{tpu_custom_call.1} parent=47 // pred_check
          %p733 = pneg %p217
        $region58: #{tpu_custom_call.1} parent=47 // pred_check_branch
          %735 = sbr.rel (%p733) target = $region60
        $region59: #{tpu_custom_call.1} parent=47 // pred_region
          %737 = vsyncadd %s729, 0
          %s738 = smul.addr %s28, 4
          %s739 = smul.addr %s27, 8
          %s740 = sadd.s32 %s738, %s739
          %s741 = smul.addr %s740, 8
          %s742 = scalar_lea.hbm %s7, %s741
          %s743 = sshll.u32 %s732, 4
          %s744 = int_to_ptr.vmem [resolvable:$true] %s743
          %s745 = sshll.u32 %s742, 4
          %s746 = int_to_ptr.hbm [resolvable:$true] %s745
          %751 = dma.vmem_to_hbm [thread:$0]  %s744, 512, %s746, %s729, 256, 256, 16
        $region60: #{tpu_custom_call.1} parent=47 // pred_fallthru
          _
      $region48: #{tpu_custom_call.1} parent=5 // pred_fallthru
        _
      %p752 = scmp.le.s32.totalorder 2, %s17
      // Predicated region
      $region61: #{tpu_custom_call.1} parent=5 // pred_check
        %p753 = pneg %p752
      $region62: #{tpu_custom_call.1} parent=5 // pred_check_branch
        %755 = sbr.rel (%p753) target = $region64
      $region63: #{tpu_custom_call.1} parent=5 // pred_region
        %s756 = ssub.s32 %s17, 2
        // Predicated region
        $region65: #{tpu_custom_call.1} parent=63 // pred_check
          %p757 = pneg %p223
        $region66: #{tpu_custom_call.1} parent=63 // pred_check_branch
          %759 = sbr.rel (%p757) target = $region68
        $region67: #{tpu_custom_call.1} parent=63 // pred_region
          %s760 = sand.u32 %s208, 1
          %s761 = scalar_lea.sflag [#allocation4], %s760
          %s762 = sand.u32 %s208, 1
          %s763 = smul.addr %s762, 32
          %s764 = scalar_lea.vmem [#allocation5], %s763
          %766 = dma.done %s761, 512
        $region68: #{tpu_custom_call.1} parent=63 // pred_fallthru
          _
      $region64: #{tpu_custom_call.1} parent=5 // pred_fallthru
        _
    $region6: #{tpu_custom_call.1} parent=1 // loop_footer
      %s21 = sadd.s32 1, %s17
    $region7: #{tpu_custom_call.1} parent=1 // loop_footer_branch
      %16 = sbr.rel target = $region3
    $region8: #{tpu_custom_call.1} parent=1 // loop_exit
      _
    %767 = vsyncpa [#allocation3], 1
    %s768 = scalar_lea.sflag [#allocation3], 1
    %769 = vsyncpa %s768, 1
    %770 = vsyncpa [#allocation4], 1
    %s771 = scalar_lea.sflag [#allocation4], 1
    %772 = vsyncpa %s771, 1

</llo_original>
